<compile_context>
chip_gen: v6e
topology: v6e:2x2x1
jax: 0.10.0
libtpu: 0.0.40
codegen_flags: <defaults>
</compile_context>

<pallas_src>
import jax
import jax.numpy as jnp
from jax.experimental import pallas as pl
from jax.experimental.pallas import tpu as pltpu


def _cdiv(a, b):
    return -(-a // b)


def _round_up(x, m):
    return (x + m - 1) // m * m


def _sublane(itemsize):
    # Min sublane tile: 8 for 4-byte, 16 for 2-byte, 32 for 1-byte dtypes.
    return 8 * max(1, 4 // itemsize)


def _padded_slab_bytes(rows, cols, itemsize):
    # One (rows, cols) slab padded to TPU (sublane, 128-lane) tiling.
    return _round_up(rows, _sublane(itemsize)) * _round_up(cols, 128) * itemsize


def patch_embed_forward(x, weight, bias, patch_size, *, tg=None,
                        compute_dtype=jnp.bfloat16):
    """x: (B, Cin, H, W). weight: (Cout, Cin, p, p). bias: (Cout,).

    Returns (B, num_patches, Cout), matching
    `proj(x).view(b, c, h*w).transpose(1, 2)` of the reference module.
    """
    B, Cin, H, W = x.shape
    p = patch_size
    assert H % p == 0 and W % p == 0, "H/W must be divisible by patch_size"
    Cout = weight.shape[0]
    Hp, Wp = H // p, W // p

    G = B * Hp          # output "row groups": one per (batch, patch-row)
    K1 = p * Cin        # contraction chunk per kh: (kw, ci)

    cdt = jnp.dtype(compute_dtype)
    odt = jnp.dtype(x.dtype)

    # --- HBM-side prep: one NCHW->NHWC transpose (fused with the bf16 cast under
    #     jit), then pure reshapes only.  No im2col, no zero-pad. ---
    x_nhwc = x.transpose(0, 2, 3, 1).astype(compute_dtype)       # (B, H, W, Cin)
    x4 = x_nhwc.reshape(G, p, Wp, K1)                            # pure reshape

    # Conv weight (Cout, Cin, p, p) -> (kh, (kw,ci), Cout); matches x4's (kw,ci)
    # flattening (ci fastest).  Tiny; stays resident in VMEM.
    w_r = weight.transpose(2, 3, 1, 0).reshape(p, K1, Cout).astype(compute_dtype)
    b_r = bias.reshape(1, Cout).astype(jnp.float32)

    # --- row-group tile: keep >=2 grid blocks for megacore, 16-aligned when big ---
    if tg is None:
        if G >= 32:
            tg = min(256, _round_up(_cdiv(G, 2), 16))
        elif G >= 2:
            tg = _cdiv(G, 2)
        else:
            tg = G
    tg = max(1, min(tg, G))

    def vmem_bytes(tg_):
        x_blk = tg_ * _padded_slab_bytes(Wp, K1, cdt.itemsize)      # input tile
        o_blk = tg_ * _padded_slab_bytes(Wp, Cout, odt.itemsize)    # output tile
        a_blk = tg_ * _padded_slab_bytes(Wp, Cout, 4)               # f32 acc
        w_res = p * _padded_slab_bytes(K1, Cout, cdt.itemsize)      # resident W
        b_res = _padded_slab_bytes(1, Cout, 4)                      # resident bias
        return 2 * x_blk + 2 * o_blk + a_blk + 2 * w_res + 2 * b_res

    budget = 40 * 1024 * 1024          # conservative: leaves slack on v7x (64 MiB)
    while tg > 16 and vmem_bytes(tg) > budget:
        tg = max(16, tg // 2)
    vmem_limit = int(min(max(vmem_bytes(tg) + 8 * 1024 * 1024, 32 * 1024 * 1024),
                         56 * 1024 * 1024))

    grid_g = _cdiv(G, tg)

    def kernel(x_ref, w_ref, b_ref, o_ref, acc_ref):
        # x_ref:   (tg, Wp, K1)    one kh-slice of the row-group tile
        # w_ref:   (p, K1, Cout)   full reshaped conv weight, resident
        # b_ref:   (1, Cout)       bias (f32), resident
        # o_ref:   (tg, Wp, Cout)  output tile (resident across the kh axis)
        # acc_ref: (tg, Wp, Cout)  f32 accumulator scratch
        kh = pl.program_id(1)

        @pl.when(kh == 0)
        def _init():
            acc_ref[...] = jnp.zeros_like(acc_ref)

        w_kh = w_ref[kh]                                  # (K1, Cout)
        for wp in range(Wp):                              # static unroll (small)
            lhs = x_ref[:, wp, :]                         # (tg, K1)
            acc_ref[:, wp, :] += jnp.dot(
                lhs, w_kh, preferred_element_type=jnp.float32)

        @pl.when(kh == p - 1)
        def _finalize():
            o_ref[...] = (acc_ref[...] + b_ref[...]).astype(o_ref.dtype)

    out3 = pl.pallas_call(
        kernel,
        out_shape=jax.ShapeDtypeStruct((G, Wp, Cout), x.dtype),
        grid_spec=pltpu.PrefetchScalarGridSpec(
            num_scalar_prefetch=0,
            grid=(grid_g, p),                              # kh = reduction, last
            in_specs=[
                # x4: one contiguous (tg, 1, Wp, K1) strip per step; kh squeezed.
                pl.BlockSpec((tg, None, Wp, K1), lambda i, kh: (i, kh, 0, 0)),
                # weight: constant index_map -> DMA'd once, resident in VMEM.
                pl.BlockSpec((p, K1, Cout), lambda i, kh: (0, 0, 0)),
                # bias: resident.
                pl.BlockSpec((1, Cout), lambda i, kh: (0, 0)),
            ],
            out_specs=pl.BlockSpec((tg, Wp, Cout), lambda i, kh: (i, 0, 0)),
            scratch_shapes=[pltpu.VMEM((tg, Wp, Cout), jnp.float32)],
        ),
        compiler_params=pltpu.CompilerParams(
            dimension_semantics=("parallel", "arbitrary"),  # split M over both TCs
            vmem_limit_bytes=vmem_limit,
        ),
    )(x4, w_r, b_r)

    # (B*Hp, Wp, Cout) -> (B, num_patches, Cout); pure reshape, patch index hp*Wp+wp.
    return out3.reshape(B, Hp * Wp, Cout)


if __name__ == "__main__":
    # Module config (small, consistent with the forward pass)
    patch_size = 4
    in_channels = 4
    out_channels = 128

    key = jax.random.PRNGKey(0)
    kx, kw, kb = jax.random.split(key, 3)
    x = jax.random.normal(kx, (2, in_channels, 16, 16), dtype=jnp.float32)

    # Deterministic Conv2d-shaped parameters
    fan_in = in_channels * patch_size * patch_size
    bound = 1.0 / (fan_in ** 0.5)
    weight = jax.random.uniform(
        kw, (out_channels, in_channels, patch_size, patch_size),
        minval=-bound, maxval=bound, dtype=jnp.float32)
    bias = jax.random.uniform(
        kb, (out_channels,), minval=-bound, maxval=bound, dtype=jnp.float32)

    patch_embed = jax.jit(patch_embed_forward,
                          static_argnames=("patch_size", "tg", "compute_dtype"))
    out = patch_embed(x, weight, bias, patch_size=patch_size)
    out = jax.block_until_ready(out)

    # Plain-XLA f32 reference of the same module semantics.
    ref = jax.lax.conv_general_dilated(
        x, weight, window_strides=(patch_size, patch_size), padding="VALID",
        dimension_numbers=("NCHW", "OIHW", "NCHW"))
    ref = ref + bias[None, :, None, None]
    Br, Cr, Hr, Wr = ref.shape
    ref = ref.reshape(Br, Cr, Hr * Wr).transpose(0, 2, 1)

    assert out.shape == (2, 16, out_channels), out.shape
    # bf16 operands with f32 accumulation -> loose tolerance vs the f32 reference.
    err = float(jnp.max(jnp.abs(out.astype(jnp.float32) - ref)))
    assert jnp.allclose(out.astype(jnp.float32), ref, atol=3e-2, rtol=3e-2), err

    print("KERNEL_OK")
</pallas_src>

<mosaic_0001>
module attributes {stable_mosaic.version = 11 : i64} {
  func.func @kernel(%arg0: i32, %arg1: i32, %arg2: memref<4x1x4x16xbf16, #tpu.memory_space<vmem>>, %arg3: memref<4x16x128xbf16, #tpu.memory_space<vmem>>, %arg4: memref<1x128xf32, #tpu.memory_space<vmem>>, %arg5: memref<4x4x128xf32, #tpu.memory_space<vmem>>, %arg6: memref<4x4x128xf32, #tpu.memory_space<vmem>>) attributes {dimension_semantics = [#tpu.dimension_semantics<parallel>, #tpu.dimension_semantics<arbitrary>], iteration_bounds = array<i64: 2, 4>, scalar_prefetch = 0 : i64, scratch_operands = 1 : i64, tpu.core_type = #tpu.core_type<tc>, window_params = [{transform_indices = @transform_0, window_bounds = array<i64: 4, 1, 4, 16>}, {pipeline_mode = #tpu.pipeline_mode<synchronous>, transform_indices = @transform_1, window_bounds = array<i64: 4, 16, 128>}, {pipeline_mode = #tpu.pipeline_mode<synchronous>, transform_indices = @transform_2, window_bounds = array<i64: 1, 128>}, {transform_indices = @transform_3, window_bounds = array<i64: 4, 4, 128>}]} {
    %c0_i32 = arith.constant 0 : i32
    %0 = arith.cmpi eq, %arg1, %c0_i32 : i32
    %1 = arith.extui %0 : i1 to i32
    %c0_i32_0 = arith.constant 0 : i32
    %2 = arith.cmpi ne, %1, %c0_i32_0 : i32
    scf.if %2 {
      %cst_43 = arith.constant 0.000000e+00 : f32
      %45 = vector.broadcast %cst_43 : f32 to vector<4x4x128xf32>
      %c0_44 = arith.constant 0 : index
      %c0_45 = arith.constant 0 : index
      %c0_46 = arith.constant 0 : index
      %46 = vector.load %arg6[%c0_44, %c0_45, %c0_46] : memref<4x4x128xf32, #tpu.memory_space<vmem>>, vector<4x4x128xf32>
      tpu.vector_store %arg6[%c0_44, %c0_45, %c0_46], %45 {strides = array<i32>} : memref<4x4x128xf32, #tpu.memory_space<vmem>>, vector<4x4x128xf32>,
    } else {
    }
    %3 = arith.index_cast %arg1 : i32 to index
    %c0 = arith.constant 0 : index
    %c0_1 = arith.constant 0 : index
    %4 = vector.load %arg3[%3, %c0, %c0_1] : memref<4x16x128xbf16, #tpu.memory_space<vmem>>, vector<1x16x128xbf16>
    %5 = vector.shape_cast %4 : vector<1x16x128xbf16> to vector<16x128xbf16>
    %c0_2 = arith.constant 0 : index
    %c0_3 = arith.constant 0 : index
    %c0_4 = arith.constant 0 : index
    %c0_5 = arith.constant 0 : index
    %6 = vector.load %arg2[%c0_2, %c0_3, %c0_4, %c0_5] : memref<4x1x4x16xbf16, #tpu.memory_space<vmem>>, vector<4x1x1x16xbf16>
    %7 = vector.shape_cast %6 : vector<4x1x1x16xbf16> to vector<4x16xbf16>
    %c0_6 = arith.constant 0 : index
    %c0_7 = arith.constant 0 : index
    %c0_8 = arith.constant 0 : index
    %8 = vector.load %arg6[%c0_6, %c0_7, %c0_8] : memref<4x4x128xf32, #tpu.memory_space<vmem>>, vector<4x1x128xf32>
    %9 = vector.shape_cast %8 : vector<4x1x128xf32> to vector<4x128xf32>
    %cst = arith.constant dense<0.000000e+00> : vector<4x128xf32>
    %10 = tpu.matmul %7, %5, %cst {dimension_numbers = #tpu.dot_dimension_numbers<[1], [0], [0], [1], [0, 0, 1, 1], [], []>} : vector<4x16xbf16>, vector<16x128xbf16>, vector<4x128xf32> -> vector<4x128xf32>
    %11 = arith.addf %9, %10 : vector<4x128xf32>
    %c0_9 = arith.constant 0 : index
    %c0_10 = arith.constant 0 : index
    %c0_11 = arith.constant 0 : index
    %12 = vector.load %arg6[%c0_9, %c0_10, %c0_11] : memref<4x4x128xf32, #tpu.memory_space<vmem>>, vector<4x1x128xf32>
    %13 = vector.shape_cast %12 : vector<4x1x128xf32> to vector<4x128xf32>
    %14 = vector.shape_cast %11 : vector<4x128xf32> to vector<4x1x128xf32>
    tpu.vector_store %arg6[%c0_9, %c0_10, %c0_11], %14 {strides = array<i32>} : memref<4x4x128xf32, #tpu.memory_space<vmem>>, vector<4x1x128xf32>,
    %c0_12 = arith.constant 0 : index
    %c0_13 = arith.constant 0 : index
    %c1 = arith.constant 1 : index
    %c0_14 = arith.constant 0 : index
    %15 = vector.load %arg2[%c0_12, %c0_13, %c1, %c0_14] : memref<4x1x4x16xbf16, #tpu.memory_space<vmem>>, vector<4x1x1x16xbf16>
    %16 = vector.shape_cast %15 : vector<4x1x1x16xbf16> to vector<4x16xbf16>
    %c0_15 = arith.constant 0 : index
    %c1_16 = arith.constant 1 : index
    %c0_17 = arith.constant 0 : index
    %17 = vector.load %arg6[%c0_15, %c1_16, %c0_17] : memref<4x4x128xf32, #tpu.memory_space<vmem>>, vector<4x1x128xf32>
    %18 = vector.shape_cast %17 : vector<4x1x128xf32> to vector<4x128xf32>
    %cst_18 = arith.constant dense<0.000000e+00> : vector<4x128xf32>
    %19 = tpu.matmul %16, %5, %cst_18 {dimension_numbers = #tpu.dot_dimension_numbers<[1], [0], [0], [1], [0, 0, 1, 1], [], []>} : vector<4x16xbf16>, vector<16x128xbf16>, vector<4x128xf32> -> vector<4x128xf32>
    %20 = arith.addf %18, %19 : vector<4x128xf32>
    %c0_19 = arith.constant 0 : index
    %c1_20 = arith.constant 1 : index
    %c0_21 = arith.constant 0 : index
    %21 = vector.load %arg6[%c0_19, %c1_20, %c0_21] : memref<4x4x128xf32, #tpu.memory_space<vmem>>, vector<4x1x128xf32>
    %22 = vector.shape_cast %21 : vector<4x1x128xf32> to vector<4x128xf32>
    %23 = vector.shape_cast %20 : vector<4x128xf32> to vector<4x1x128xf32>
    tpu.vector_store %arg6[%c0_19, %c1_20, %c0_21], %23 {strides = array<i32>} : memref<4x4x128xf32, #tpu.memory_space<vmem>>, vector<4x1x128xf32>,
    %c0_22 = arith.constant 0 : index
    %c0_23 = arith.constant 0 : index
    %c2 = arith.constant 2 : index
    %c0_24 = arith.constant 0 : index
    %24 = vector.load %arg2[%c0_22, %c0_23, %c2, %c0_24] : memref<4x1x4x16xbf16, #tpu.memory_space<vmem>>, vector<4x1x1x16xbf16>
    %25 = vector.shape_cast %24 : vector<4x1x1x16xbf16> to vector<4x16xbf16>
    %c0_25 = arith.constant 0 : index
    %c2_26 = arith.constant 2 : index
    %c0_27 = arith.constant 0 : index
    %26 = vector.load %arg6[%c0_25, %c2_26, %c0_27] : memref<4x4x128xf32, #tpu.memory_space<vmem>>, vector<4x1x128xf32>
    %27 = vector.shape_cast %26 : vector<4x1x128xf32> to vector<4x128xf32>
    %cst_28 = arith.constant dense<0.000000e+00> : vector<4x128xf32>
    %28 = tpu.matmul %25, %5, %cst_28 {dimension_numbers = #tpu.dot_dimension_numbers<[1], [0], [0], [1], [0, 0, 1, 1], [], []>} : vector<4x16xbf16>, vector<16x128xbf16>, vector<4x128xf32> -> vector<4x128xf32>
    %29 = arith.addf %27, %28 : vector<4x128xf32>
    %c0_29 = arith.constant 0 : index
    %c2_30 = arith.constant 2 : index
    %c0_31 = arith.constant 0 : index
    %30 = vector.load %arg6[%c0_29, %c2_30, %c0_31] : memref<4x4x128xf32, #tpu.memory_space<vmem>>, vector<4x1x128xf32>
    %31 = vector.shape_cast %30 : vector<4x1x128xf32> to vector<4x128xf32>
    %32 = vector.shape_cast %29 : vector<4x128xf32> to vector<4x1x128xf32>
    tpu.vector_store %arg6[%c0_29, %c2_30, %c0_31], %32 {strides = array<i32>} : memref<4x4x128xf32, #tpu.memory_space<vmem>>, vector<4x1x128xf32>,
    %c0_32 = arith.constant 0 : index
    %c0_33 = arith.constant 0 : index
    %c3 = arith.constant 3 : index
    %c0_34 = arith.constant 0 : index
    %33 = vector.load %arg2[%c0_32, %c0_33, %c3, %c0_34] : memref<4x1x4x16xbf16, #tpu.memory_space<vmem>>, vector<4x1x1x16xbf16>
    %34 = vector.shape_cast %33 : vector<4x1x1x16xbf16> to vector<4x16xbf16>
    %c0_35 = arith.constant 0 : index
    %c3_36 = arith.constant 3 : index
    %c0_37 = arith.constant 0 : index
    %35 = vector.load %arg6[%c0_35, %c3_36, %c0_37] : memref<4x4x128xf32, #tpu.memory_space<vmem>>, vector<4x1x128xf32>
    %36 = vector.shape_cast %35 : vector<4x1x128xf32> to vector<4x128xf32>
    %cst_38 = arith.constant dense<0.000000e+00> : vector<4x128xf32>
    %37 = tpu.matmul %34, %5, %cst_38 {dimension_numbers = #tpu.dot_dimension_numbers<[1], [0], [0], [1], [0, 0, 1, 1], [], []>} : vector<4x16xbf16>, vector<16x128xbf16>, vector<4x128xf32> -> vector<4x128xf32>
    %38 = arith.addf %36, %37 : vector<4x128xf32>
    %c0_39 = arith.constant 0 : index
    %c3_40 = arith.constant 3 : index
    %c0_41 = arith.constant 0 : index
    %39 = vector.load %arg6[%c0_39, %c3_40, %c0_41] : memref<4x4x128xf32, #tpu.memory_space<vmem>>, vector<4x1x128xf32>
    %40 = vector.shape_cast %39 : vector<4x1x128xf32> to vector<4x128xf32>
    %41 = vector.shape_cast %38 : vector<4x128xf32> to vector<4x1x128xf32>
    tpu.vector_store %arg6[%c0_39, %c3_40, %c0_41], %41 {strides = array<i32>} : memref<4x4x128xf32, #tpu.memory_space<vmem>>, vector<4x1x128xf32>,
    %c3_i32 = arith.constant 3 : i32
    %42 = arith.cmpi eq, %arg1, %c3_i32 : i32
    %43 = arith.extui %42 : i1 to i32
    %c0_i32_42 = arith.constant 0 : i32
    %44 = arith.cmpi ne, %43, %c0_i32_42 : i32
    scf.if %44 {
      %c0_43 = arith.constant 0 : index
      %c0_44 = arith.constant 0 : index
      %c0_45 = arith.constant 0 : index
      %45 = vector.load %arg6[%c0_43, %c0_44, %c0_45] : memref<4x4x128xf32, #tpu.memory_space<vmem>>, vector<4x4x128xf32>
      %c0_46 = arith.constant 0 : index
      %c0_47 = arith.constant 0 : index
      %46 = vector.load %arg4[%c0_46, %c0_47] : memref<1x128xf32, #tpu.memory_space<vmem>>, vector<1x128xf32>
      %47 = vector.shape_cast %46 : vector<1x128xf32> to vector<1x1x128xf32>
      %48 = vector.broadcast %47 : vector<1x1x128xf32> to vector<4x4x128xf32>
      %49 = arith.addf %45, %48 : vector<4x4x128xf32>
      %c0_48 = arith.constant 0 : index
      %c0_49 = arith.constant 0 : index
      %c0_50 = arith.constant 0 : index
      %50 = vector.load %arg5[%c0_48, %c0_49, %c0_50] : memref<4x4x128xf32, #tpu.memory_space<vmem>>, vector<4x4x128xf32>
      tpu.vector_store %arg5[%c0_48, %c0_49, %c0_50], %49 {strides = array<i32>} : memref<4x4x128xf32, #tpu.memory_space<vmem>>, vector<4x4x128xf32>,
    } else {
    }
    return
  }
  func.func @transform_0(%arg0: i32, %arg1: i32) -> (i32, i32, i32, i32) {
    %c0_i32 = arith.constant 0 : i32
    %c0_i32_0 = arith.constant 0 : i32
    %c0_i32_1 = arith.constant 0 : i32
    return %arg0, %arg1, %c0_i32, %c0_i32_0 : i32, i32, i32, i32
  }
  func.func @transform_1(%arg0: i32, %arg1: i32) -> (i32, i32, i32) {
    %c0_i32 = arith.constant 0 : i32
    %c0_i32_0 = arith.constant 0 : i32
    %c0_i32_1 = arith.constant 0 : i32
    %c0_i32_2 = arith.constant 0 : i32
    return %c0_i32, %c0_i32_0, %c0_i32_1 : i32, i32, i32
  }
  func.func @transform_2(%arg0: i32, %arg1: i32) -> (i32, i32) {
    %c0_i32 = arith.constant 0 : i32
    %c0_i32_0 = arith.constant 0 : i32
    %c0_i32_1 = arith.constant 0 : i32
    return %c0_i32, %c0_i32_0 : i32, i32
  }
  func.func @transform_3(%arg0: i32, %arg1: i32) -> (i32, i32, i32) {
    %c0_i32 = arith.constant 0 : i32
    %c0_i32_0 = arith.constant 0 : i32
    %c0_i32_1 = arith.constant 0 : i32
    return %arg0, %c0_i32, %c0_i32_0 : i32, i32, i32
  }
}

</mosaic_0001>

<llo_original>
// kernel: patch_embed_forward.1
$region0: #{patch_embed_forward.1}
  #allocation0 [shape = 'u32[]', space=smem, size = 0x4, offset = 0x4, fixed_abs, tag = 'smem constant byte address 0x4 - core index']
  #allocation1 [shape = 'u32[144,128]{1,0:T(1,128)}', space=vmem, size = 0x12000, scoped, tag = 'internal scratch']
  #allocation2 [shape = 'f32[4,4,128]{2,1,0:T(4,128)}', space=vmem, size = 0x2000, scoped, tag = 'scratch operand']
  %s0 = inlined_call_operand.vmem [shape: bf16[8,4,4,16], index: 0, kind: input, shape index: {}]
  %s1 = inlined_call_operand.vmem [shape: bf16[4,16,128], index: 1, kind: input, shape index: {}]
  %s2 = inlined_call_operand.vmem [shape: f32[1,128], index: 2, kind: input, shape index: {}]
  %s3 = inlined_call_operand.hbm [shape: f32[8,4,128], index: 3, kind: output, shape index: {}]
  %s4 = sld [smem:[#allocation0]]
  $region94: #{patch_embed_forward.1} parent=0
    _
  %s6 = ssub.s32 1, %s4
  %s7 = scalar_select 0, %s6, %s4
  $region1: #{patch_embed_forward.1} parent=0
    #allocation3 [shape = 'u8[8192]{0}', space=vmem, size = 0x2000, scoped, tag = 'input window, operand 0']
    #allocation4 [shape = 'u8[16384]{0}', space=vmem, size = 0x4000, scoped, tag = 'output window, operand 0']
    #allocation5 [shape = 's32[2]{0}', space=sflag, size = 0x8, scoped, tag = 'scoped memory for patch_embed_forward.1']
    %8 = vsyncpa [#allocation5], 0
    %s9 = scalar_lea.sflag [#allocation5], 1
    %10 = vsyncpa %s9, 0
    loop: start=0, step=1, limit=10
    $region2: #{patch_embed_forward.1} parent=1 // loop_pre_header
      _
    $region3: #{patch_embed_forward.1} parent=1 // loop_header
      %s12 = sphi 0, %s16
      %p13 = scmp.ge.s32.totalorder %s12, 10
      %s19 = sphi 0, %s31
      %s20 = sphi 0, %s27
      %s21 = sphi 0, %s19
      %s22 = sphi 0, %s20
      %s23 = sphi 0, %s21
      %s24 = sphi 0, %s22
      %s36 = sphi 0, %s38
      %s39 = sphi 0, %s36
      %s40 = sphi 0, %s39
      %s56 = sphi 0, %s40
      %s60 = sphi 0, %s60
      %s62 = sphi 0, %s60
      %s63 = sphi 0, %s62
      %s77 = sphi 0, %s63
      %s81 = sphi 0, %s81
      %s83 = sphi 0, %s81
      %s84 = sphi 0, %s83
      %s98 = sphi 0, %s84
      %s104 = sphi 0, %s106
      %s107 = sphi 0, %s104
      %s108 = sphi 0, %s107
      %s124 = sphi 0, %s108
    $region4: #{patch_embed_forward.1} parent=1 // loop_header_branch
      %15 = sbr.rel (%p13) target = $region8
    $region5: #{patch_embed_forward.1} parent=1 // loop_body
      %s17 = ssub.s32 %s12, 1
      %s18 = ssub.s32 %s12, 2
      %s25 = sadd.s32 1, %s20
      %p26 = scmp.ge.s32.totalorder %s25, 4
      %s27 = scalar_select %p26, 0, %s25
      %s28 = sadd.s32 1, %s19
      %s29 = scalar_select %p26, %s28, %s19
      %p30 = scmp.ge.s32.totalorder %s29, 2
      %s31 = scalar_select %p30, 0, %s29
      %s32 = ssub.s32 %s19, %s31
      %s33 = ssub.s32 %s20, %s27
      %s34 = sor.u32 %s32, %s33
      %p35 = scmp.eq.s32.totalorder %s34, 0
      %s37 = sadd.s32 %s36, 1
      %s38 = scalar_select %p35, %s36, %s37
      %p41 = pneg %p35
      %p42 = scmp.eq.s32.totalorder %s12, 7
      %p43 = por %p41, %p42
      %p44 = scmp.ne.s32.totalorder %s36, %s39
      %p45 = scmp.eq.s32.totalorder %s12, 0
      %p46 = por %p44, %p45
      %p47 = scmp.ne.s32.totalorder %s36, %s39
      %p48 = scmp.eq.s32.totalorder %s17, 7
      %p49 = por %p47, %p48
      %p50 = scmp.ne.s32.totalorder %s39, %s40
      %p51 = scmp.eq.s32.totalorder %s17, 0
      %p52 = por %p50, %p51
      %p53 = scmp.ne.s32.totalorder %s39, %s40
      %p54 = scmp.eq.s32.totalorder %s18, 7
      %p55 = por %p53, %p54
      %p57 = scmp.ne.s32.totalorder %s40, %s56
      %p58 = scmp.eq.s32.totalorder %s18, 0
      %p59 = por %p57, %p58
      %s61 = sadd.s32 %s60, 1
      %p64 = scmp.eq.s32.totalorder %s12, 7
      %p65 = scmp.ne.s32.totalorder %s60, %s62
      %p66 = scmp.eq.s32.totalorder %s12, 0
      %p67 = por %p65, %p66
      %p68 = scmp.ne.s32.totalorder %s60, %s62
      %p69 = scmp.eq.s32.totalorder %s17, 7
      %p70 = por %p68, %p69
      %p71 = scmp.ne.s32.totalorder %s62, %s63
      %p72 = scmp.eq.s32.totalorder %s17, 0
      %p73 = por %p71, %p72
      %p74 = scmp.ne.s32.totalorder %s62, %s63
      %p75 = scmp.eq.s32.totalorder %s18, 7
      %p76 = por %p74, %p75
      %p78 = scmp.ne.s32.totalorder %s63, %s77
      %p79 = scmp.eq.s32.totalorder %s18, 0
      %p80 = por %p78, %p79
      %s82 = sadd.s32 %s81, 1
      %p85 = scmp.eq.s32.totalorder %s12, 7
      %p86 = scmp.ne.s32.totalorder %s81, %s83
      %p87 = scmp.eq.s32.totalorder %s12, 0
      %p88 = por %p86, %p87
      %p89 = scmp.ne.s32.totalorder %s81, %s83
      %p90 = scmp.eq.s32.totalorder %s17, 7
      %p91 = por %p89, %p90
      %p92 = scmp.ne.s32.totalorder %s83, %s84
      %p93 = scmp.eq.s32.totalorder %s17, 0
      %p94 = por %p92, %p93
      %p95 = scmp.ne.s32.totalorder %s83, %s84
      %p96 = scmp.eq.s32.totalorder %s18, 7
      %p97 = por %p95, %p96
      %p99 = scmp.ne.s32.totalorder %s84, %s98
      %p100 = scmp.eq.s32.totalorder %s18, 0
      %p101 = por %p99, %p100
      %s102 = ssub.s32 %s19, %s31
      %p103 = scmp.eq.s32.totalorder %s102, 0
      %s105 = sadd.s32 %s104, 1
      %s106 = scalar_select %p103, %s104, %s105
      %p109 = pneg %p103
      %p110 = scmp.eq.s32.totalorder %s12, 7
      %p111 = por %p109, %p110
      %p112 = scmp.ne.s32.totalorder %s104, %s107
      %p113 = scmp.eq.s32.totalorder %s12, 0
      %p114 = por %p112, %p113
      %p115 = scmp.ne.s32.totalorder %s104, %s107
      %p116 = scmp.eq.s32.totalorder %s17, 7
      %p117 = por %p115, %p116
      %p118 = scmp.ne.s32.totalorder %s107, %s108
      %p119 = scmp.eq.s32.totalorder %s17, 0
      %p120 = por %p118, %p119
      %p121 = scmp.ne.s32.totalorder %s107, %s108
      %p122 = scmp.eq.s32.totalorder %s18, 7
      %p123 = por %p121, %p122
      %p125 = scmp.ne.s32.totalorder %s108, %s124
      %p126 = scmp.eq.s32.totalorder %s18, 0
      %p127 = por %p125, %p126
      %p128 = scmp.le.s32.totalorder 1, %s12
      %p129 = scmp.lt.s32.totalorder %s12, 9
      %p130 = pnand %p128, %p129
      %p131 = pneg %p130
      // Predicated region
      $region9: #{patch_embed_forward.1} parent=5 // pred_check
        _
      $region10: #{patch_embed_forward.1} parent=5 // pred_check_branch
        %133 = sbr.rel (%p130) target = $region12
      $region11: #{patch_embed_forward.1} parent=5 // pred_region
        %s134 = ssub.s32 %s12, 1
        // Predicated region
        $region13: #{patch_embed_forward.1} parent=11 // pred_check
          %p135 = pneg %p73
        $region14: #{patch_embed_forward.1} parent=11 // pred_check_branch
          %137 = sbr.rel (%p135) target = $region16
        $region15: #{patch_embed_forward.1} parent=11 // pred_region
          _
        $region16: #{patch_embed_forward.1} parent=11 // pred_fallthru
          _
        // Predicated region
        $region17: #{patch_embed_forward.1} parent=11 // pred_check
          %p138 = pneg %p94
        $region18: #{patch_embed_forward.1} parent=11 // pred_check_branch
          %140 = sbr.rel (%p138) target = $region20
        $region19: #{patch_embed_forward.1} parent=11 // pred_region
          _
        $region20: #{patch_embed_forward.1} parent=11 // pred_fallthru
          _
      $region12: #{patch_embed_forward.1} parent=5 // pred_fallthru
        _
      %p141 = scmp.lt.s32.totalorder %s12, 8
      // Predicated region
      $region21: #{patch_embed_forward.1} parent=5 // pred_check
        %p142 = pneg %p141
      $region22: #{patch_embed_forward.1} parent=5 // pred_check_branch
        %144 = sbr.rel (%p142) target = $region24
      $region23: #{patch_embed_forward.1} parent=5 // pred_region
        // Predicated region
        $region25: #{patch_embed_forward.1} parent=23 // pred_check
          %p145 = pneg %p46
        $region26: #{patch_embed_forward.1} parent=23 // pred_check_branch
          %147 = sbr.rel (%p145) target = $region28
        $region27: #{patch_embed_forward.1} parent=23 // pred_region
          %s148 = sand.u32 %s36, 1
          %s149 = sand.u32 %s36, 1
          %s150 = smul.addr %s149, 8
          %s151 = scalar_lea.vmem [#allocation3], %s150
          %s152 = smul.u32 4, %s19
          %s153 = smul.addr %s152, 4
          %s154 = sadd.s32 %s20, %s153
          %s155 = smul.addr %s154, 2
          %s156 = scalar_lea.vmem %s0, %s155
          // Predicated region
          $region29: #{patch_embed_forward.1} parent=27 // pred_check
            _
          $region30: #{patch_embed_forward.1} parent=27 // pred_check_branch
            %158 = sbr.rel (0) target = $region32
          $region31: #{patch_embed_forward.1} parent=27 // pred_region
            // Predicated region
            $region33: #{patch_embed_forward.1} parent=31 // pred_check
              _
            $region34: #{patch_embed_forward.1} parent=31 // pred_check_branch
              %160 = sbr.rel target = $region36
            $region35: #{patch_embed_forward.1} parent=31 // pred_region
              // Predicated region
              $region48: #{patch_embed_forward.1} parent=35 // pred_check
                _
              $region49: #{patch_embed_forward.1} parent=35 // pred_check_branch
                %182 = sbr.rel (0) target = $region51
              $region50: #{patch_embed_forward.1} parent=35 // pred_region
                loop: start=0, step=1, limit=1
                $region52: #{patch_embed_forward.1} parent=50 // loop_pre_header
                  _
                $region53: #{patch_embed_forward.1} parent=50 // loop_header
                  %s184 = sphi 0, %s188
                  %p185 = scmp.ge.s32.totalorder %s184, 1
                  %s189 = sphi %s156, %s156
                  %s190 = sphi %s151, %s151
                $region54: #{patch_embed_forward.1} parent=50 // loop_header_branch
                  %187 = sbr.rel (%p185) target = $region58
                $region55: #{patch_embed_forward.1} parent=50 // loop_body
                  _
                $region56: #{patch_embed_forward.1} parent=50 // loop_footer
                  %s188 = sadd.s32 1, %s184
                $region57: #{patch_embed_forward.1} parent=50 // loop_footer_branch
                  %183 = sbr.rel target = $region53
                $region58: #{patch_embed_forward.1} parent=50 // loop_exit
                  _
                %s192 = ssub.s32 4, 1
                loop: start=0, step=1, limit=1
                $region59: #{patch_embed_forward.1} parent=50 // loop_pre_header
                  _
                $region60: #{patch_embed_forward.1} parent=50 // loop_header
                  %s194 = sphi 0, %s198
                  %p195 = scmp.ge.s32.totalorder %s194, 1
                  %s199 = sphi %s156, %s156
                  %s200 = sphi %s151, %s151
                $region61: #{patch_embed_forward.1} parent=50 // loop_header_branch
                  %197 = sbr.rel (%p195) target = $region65
                $region62: #{patch_embed_forward.1} parent=50 // loop_body
                  %v201 = vld [vmem:[%s199] sm:%s192]
                  %202 = vst [vmem:[%s200] sm:%s192] %v201
                  %v203 = vld [vmem:[%s199 + $0x8] sm:%s192]
                  %204 = vst [vmem:[%s200 + $0x2] sm:%s192] %v203
                  %v205 = vld [vmem:[%s199 + $0x10] sm:%s192]
                  %206 = vst [vmem:[%s200 + $0x4] sm:%s192] %v205
                  %v207 = vld [vmem:[%s199 + $0x18] sm:%s192]
                  %208 = vst [vmem:[%s200 + $0x6] sm:%s192] %v207
                $region63: #{patch_embed_forward.1} parent=50 // loop_footer
                  %s198 = sadd.s32 1, %s194
                $region64: #{patch_embed_forward.1} parent=50 // loop_footer_branch
                  %193 = sbr.rel target = $region60
                $region65: #{patch_embed_forward.1} parent=50 // loop_exit
                  _
              $region51: #{patch_embed_forward.1} parent=35 // pred_fallthru
                _
            $region36: #{patch_embed_forward.1} parent=31 // pred_fallthru
              _
            // Predicated region
            $region37: #{patch_embed_forward.1} parent=31 // pred_check
              _
            $region38: #{patch_embed_forward.1} parent=31 // pred_check_branch
              %162 = sbr.rel (0) target = $region40
            $region39: #{patch_embed_forward.1} parent=31 // pred_region
              %s164 = ssub.s32 4, 1
              loop: start=0, step=1, limit=1
              $region41: #{patch_embed_forward.1} parent=39 // loop_pre_header
                _
              $region42: #{patch_embed_forward.1} parent=39 // loop_header
                %s166 = sphi 0, %s170
                %p167 = scmp.ge.s32.totalorder %s166, 1
                %s171 = sphi %s156, %s156
                %s172 = sphi %s151, %s151
              $region43: #{patch_embed_forward.1} parent=39 // loop_header_branch
                %169 = sbr.rel (%p167) target = $region47
              $region44: #{patch_embed_forward.1} parent=39 // loop_body
                %v173 = vld [vmem:[%s171] sm:%s164]
                %174 = vst [vmem:[%s172] sm:%s164] %v173
                %v175 = vld [vmem:[%s171 + $0x8] sm:%s164]
                %176 = vst [vmem:[%s172 + $0x2] sm:%s164] %v175
                %v177 = vld [vmem:[%s171 + $0x10] sm:%s164]
                %178 = vst [vmem:[%s172 + $0x4] sm:%s164] %v177
                %v179 = vld [vmem:[%s171 + $0x18] sm:%s164]
                %180 = vst [vmem:[%s172 + $0x6] sm:%s164] %v179
              $region45: #{patch_embed_forward.1} parent=39 // loop_footer
                %s170 = sadd.s32 1, %s166
              $region46: #{patch_embed_forward.1} parent=39 // loop_footer_branch
                %165 = sbr.rel target = $region42
              $region47: #{patch_embed_forward.1} parent=39 // loop_exit
                _
            $region40: #{patch_embed_forward.1} parent=31 // pred_fallthru
              _
          $region32: #{patch_embed_forward.1} parent=27 // pred_fallthru
            _
          %209 = vnop
        $region28: #{patch_embed_forward.1} parent=23 // pred_fallthru
          _
      $region24: #{patch_embed_forward.1} parent=5 // pred_fallthru
        _
      %p210 = scmp.le.s32.totalorder 1, %s12
      %p211 = scmp.lt.s32.totalorder %s12, 9
      %p212 = pnand %p210, %p211
      %p213 = pneg %p212
      // Predicated region
      $region66: #{patch_embed_forward.1} parent=5 // pred_check
        _
      $region67: #{patch_embed_forward.1} parent=5 // pred_check_branch
        %215 = sbr.rel (%p212) target = $region69
      $region68: #{patch_embed_forward.1} parent=5 // pred_region
        %s216 = ssub.s32 %s12, 1
        %s217 = sand.u32 %s39, 1
        %s218 = sand.u32 %s39, 1
        %s219 = smul.addr %s218, 8
        %s220 = scalar_lea.vmem [#allocation3], %s219
        // Predicated region
        $region70: #{patch_embed_forward.1} parent=68 // pred_check
          %p221 = pneg %p52
        $region71: #{patch_embed_forward.1} parent=68 // pred_check_branch
          %223 = sbr.rel (%p221) target = $region73
        $region72: #{patch_embed_forward.1} parent=68 // pred_region
          _
        $region73: #{patch_embed_forward.1} parent=68 // pred_fallthru
          _
        %s224 = sand.u32 %s39, 1
        %s225 = sand.u32 %s39, 1
        %s226 = smul.addr %s225, 8
        %s227 = scalar_lea.vmem [#allocation3], %s226
        %p228 = pneg %p52
        %p229 = pneg %p49
        %p230 = pneg %p73
        %p231 = pneg %p70
        %p232 = pneg %p94
        %p233 = pneg %p91
        %p234 = pneg %p120
        %p235 = pneg %p117
        %s236 = sand.u32 %s107, 1
        %s237 = scalar_lea.sflag [#allocation5], %s236
        %s238 = sand.u32 %s107, 1
        %s239 = smul.addr %s238, 16
        %s240 = scalar_lea.vmem [#allocation4], %s239
        %s241 = smul.u32 4, %s21
        %s242 = smul.u32 4, %s21
        %p244 = scmp.eq.s32.totalorder %s22, 0
        // Predicated region
        $region74: #{patch_embed_forward.1} parent=68 // pred_check
          %p245 = pneg %p244
        $region75: #{patch_embed_forward.1} parent=68 // pred_check_branch
          %247 = sbr.rel (%p245) target = $region77
        $region76: #{patch_embed_forward.1} parent=68 // pred_region
          %248 = vst [vmem:[#allocation2] sm:$0xf] 0.0
          %249 = vst [vmem:[#allocation2 + $0x4] sm:$0xf] 0.0
          %250 = vst [vmem:[#allocation2 + $0x8] sm:$0xf] 0.0
          %251 = vst [vmem:[#allocation2 + $0xc] sm:$0xf] 0.0
        $region77: #{patch_embed_forward.1} parent=68 // pred_fallthru
          _
        %s252 = smul.u32 %s22, 2
        %s253 = smul.addr %s252, 4
        %s254 = scalar_lea.vmem %s1, %s253
        %v255 = vld [vmem:[%s254] sm:$0xf]
        %v256 = vld [vmem:[%s254 + $0x4] sm:$0xf]
        %v257 = vld [vmem:[%s220] sm:$0x1]
        %v258 = vld [vmem:[%s220 + $0x2] sm:$0x1]
        %v259 = vld [vmem:[%s220 + $0x4] sm:$0x1]
        %v260 = vld [vmem:[%s220 + $0x6] sm:$0x1]
        %v261 = vld [vmem:[#allocation2] sm:$0x1]
        %v262 = vld [vmem:[#allocation2 + $0x4] sm:$0x1]
        %v263 = vld [vmem:[#allocation2 + $0x8] sm:$0x1]
        %v264 = vld [vmem:[#allocation2 + $0xc] sm:$0x1]
        %v270 = vunpack.c.l.s4 1983009808
        %v271 = vunpack.c.0.s8 %v270
        %v272 = vlaneseq
        %v273 = vshrl.u32 %v272, 7
        %v274 = vsub.s32 %v271, %v273
        %v275 = vrot.slane %v257, %v274
        %v277 = vunpack.c.l.s4 1983009808
        %v278 = vunpack.c.0.s8 %v277
        %v279 = vlaneseq
        %v280 = vshrl.u32 %v279, 7
        %v281 = vsub.s32 %v278, %v280
        %v282 = vrot.slane %v258, %v281
        %v284 = vunpack.c.l.s4 1983009808
        %v285 = vunpack.c.0.s8 %v284
        %v286 = vlaneseq
        %v287 = vshrl.u32 %v286, 7
        %v288 = vsub.s32 %v285, %v287
        %v289 = vrot.slane %v259, %v288
        %v291 = vunpack.c.l.s4 1983009808
        %v292 = vunpack.c.0.s8 %v291
        %v293 = vlaneseq
        %v294 = vshrl.u32 %v293, 7
        %v295 = vsub.s32 %v292, %v294
        %v296 = vrot.slane %v260, %v295
        %v297 = vunpack.c.l.b16 %v275
        %v298 = vunpack.c.l.b16 %v282
        %v299 = vunpack.c.l.b16 %v289
        %v300 = vunpack.c.l.b16 %v296
        %v301 = vrot.slane %v298, 7
        %vm302 = vcmask 1041409
        %v303 = vsel %vm302, %v301, %v297
        %v304 = vrot.slane %v299, 6
        %vm305 = vcmask 1042434
        %v306 = vsel %vm305, %v304, %v303
        %v307 = vrot.slane %v300, 5
        %vm308 = vcmask 1043459
        %v309 = vsel %vm308, %v307, %v306
        %v310 = vpack.c.b16 %v309, %v309
        %v313 = vunpack.c.l.b16 %v255
        %v314 = vunpack.c.l.b16 %v256
        %v315 = vpack.c.b16 %v314, %v313
        %vm317 = vcmask 130048
        %v319 = vsel %vm317, %v310, 0
        %321 = vmatprep.subr.bf16.mxu0 0
        %322 = vmatpush1.bf16.msra.mxu0 0
        %323 = vmatprep.subr.bf16.mxu0 0
        %324 = vmatpush1.bf16.msra.mxu0 0
        %325 = vmatprep.subr.bf16.mxu0 0
        %326 = vmatpush1.bf16.msra.mxu0 0
        %327 = vmatprep.subr.bf16.mxu0 0
        %328 = vmatpush1.bf16.msra.mxu0 0
        %329 = vmatprep.subr.bf16.mxu0 0
        %330 = vmatpush1.bf16.msra.mxu0 0
        %331 = vmatprep.subr.bf16.mxu0 0
        %332 = vmatpush1.bf16.msra.mxu0 0
        %333 = vmatprep.subr.bf16.mxu0 0
        %334 = vmatpush1.bf16.msra.mxu0 0
        %335 = vmatprep.subr.bf16.mxu0 0
        %336 = vmatpush1.bf16.msra.mxu0 %v315
        %337 = vmatprep.subr.bf16.mxu0 0
        %338 = vmatpush2.bf16.msra.mxu0 0
        %339 = vmatprep.subr.bf16.mxu0 0
        %340 = vmatpush2.bf16.msra.mxu0 0
        %341 = vmatprep.subr.bf16.mxu0 0
        %342 = vmatpush2.bf16.msra.mxu0 0
        %343 = vmatprep.subr.bf16.mxu0 0
        %344 = vmatpush2.bf16.msra.mxu0 0
        %345 = vmatprep.subr.bf16.mxu0 0
        %346 = vmatpush2.bf16.msra.mxu0 0
        %347 = vmatprep.subr.bf16.mxu0 0
        %348 = vmatpush2.bf16.msra.mxu0 0
        %349 = vmatprep.subr.bf16.mxu0 0
        %350 = vmatpush2.bf16.msra.mxu0 0
        %351 = vmatprep.subr.bf16.mxu0 0
        %352 = vmatpush2.bf16.msra.mxu0 0
        %353 = vmatprep.mubr.bf16.mxu0 0
        %354 = vmatmul.mubr.bf16.gmra.mxu0 %v319
        %v355 = vpop.f32.mrf.mxu0
        %v356 = vadd.f32 0.0, %v355
        %v357 = vpop.f32.mrf.mxu0
        %v358 = vpop.f32.mrf.mxu0
        %v359 = vpop.f32.mrf.mxu0
        %360 = vdwg.mxu0
        %v362 = vrot.slane %v356, 1
        %v363 = vrot.slane %v356, 2
        %v364 = vrot.slane %v356, 3
        %v369 = vadd.f32 %v261, %v356
        %v370 = vadd.f32 %v262, %v362
        %v371 = vadd.f32 %v263, %v363
        %v372 = vadd.f32 %v264, %v364
        %373 = vst [vmem:[#allocation2] sm:$0x1] %v369
        %374 = vst [vmem:[#allocation2 + $0x4] sm:$0x1] %v370
        %375 = vst [vmem:[#allocation2 + $0x8] sm:$0x1] %v371
        %376 = vst [vmem:[#allocation2 + $0xc] sm:$0x1] %v372
        %v377 = vld [vmem:[%s220] sm:$0x1]
        %v378 = vld [vmem:[%s220 + $0x2] sm:$0x1]
        %v379 = vld [vmem:[%s220 + $0x4] sm:$0x1]
        %v380 = vld [vmem:[%s220 + $0x6] sm:$0x1]
        %v381 = vld [vmem:[#allocation2 + $0x1] sm:$0x1]
        %v382 = vld [vmem:[#allocation2 + $0x5] sm:$0x1]
        %v383 = vld [vmem:[#allocation2 + $0x9] sm:$0x1]
        %v384 = vld [vmem:[#allocation2 + $0xd] sm:$0x1]
        %v390 = vunpack.c.l.s4 1983009808
        %v391 = vunpack.c.0.s8 %v390
        %v392 = vlaneseq
        %v393 = vshrl.u32 %v392, 7
        %v394 = vsub.s32 %v391, %v393
        %v395 = vrot.slane %v377, %v394
        %v397 = vunpack.c.l.s4 1983009808
        %v398 = vunpack.c.0.s8 %v397
        %v399 = vlaneseq
        %v400 = vshrl.u32 %v399, 7
        %v401 = vsub.s32 %v398, %v400
        %v402 = vrot.slane %v378, %v401
        %v404 = vunpack.c.l.s4 1983009808
        %v405 = vunpack.c.0.s8 %v404
        %v406 = vlaneseq
        %v407 = vshrl.u32 %v406, 7
        %v408 = vsub.s32 %v405, %v407
        %v409 = vrot.slane %v379, %v408
        %v411 = vunpack.c.l.s4 1983009808
        %v412 = vunpack.c.0.s8 %v411
        %v413 = vlaneseq
        %v414 = vshrl.u32 %v413, 7
        %v415 = vsub.s32 %v412, %v414
        %v416 = vrot.slane %v380, %v415
        %v417 = vunpack.c.l.b16 %v395
        %v418 = vunpack.c.l.b16 %v402
        %v419 = vunpack.c.l.b16 %v409
        %v420 = vunpack.c.l.b16 %v416
        %v421 = vrot.slane %v417, 1
        %v422 = vsel %vm302, %v418, %v421
        %v423 = vrot.slane %v419, 7
        %v424 = vsel %vm305, %v423, %v422
        %v425 = vrot.slane %v420, 6
        %v426 = vsel %vm308, %v425, %v424
        %v427 = vpack.c.b16 %v426, %v426
        %v429 = vsel %vm317, %v427, 0
        %431 = vmatprep.subr.bf16.mxu0 0
        %432 = vmatpush1.bf16.msra.mxu0 0
        %433 = vmatprep.subr.bf16.mxu0 0
        %434 = vmatpush1.bf16.msra.mxu0 0
        %435 = vmatprep.subr.bf16.mxu0 0
        %436 = vmatpush1.bf16.msra.mxu0 0
        %437 = vmatprep.subr.bf16.mxu0 0
        %438 = vmatpush1.bf16.msra.mxu0 0
        %439 = vmatprep.subr.bf16.mxu0 0
        %440 = vmatpush1.bf16.msra.mxu0 0
        %441 = vmatprep.subr.bf16.mxu0 0
        %442 = vmatpush1.bf16.msra.mxu0 0
        %443 = vmatprep.subr.bf16.mxu0 0
        %444 = vmatpush1.bf16.msra.mxu0 0
        %445 = vmatprep.subr.bf16.mxu0 0
        %446 = vmatpush1.bf16.msra.mxu0 %v315
        %447 = vmatprep.subr.bf16.mxu0 0
        %448 = vmatpush2.bf16.msra.mxu0 0
        %449 = vmatprep.subr.bf16.mxu0 0
        %450 = vmatpush2.bf16.msra.mxu0 0
        %451 = vmatprep.subr.bf16.mxu0 0
        %452 = vmatpush2.bf16.msra.mxu0 0
        %453 = vmatprep.subr.bf16.mxu0 0
        %454 = vmatpush2.bf16.msra.mxu0 0
        %455 = vmatprep.subr.bf16.mxu0 0
        %456 = vmatpush2.bf16.msra.mxu0 0
        %457 = vmatprep.subr.bf16.mxu0 0
        %458 = vmatpush2.bf16.msra.mxu0 0
        %459 = vmatprep.subr.bf16.mxu0 0
        %460 = vmatpush2.bf16.msra.mxu0 0
        %461 = vmatprep.subr.bf16.mxu0 0
        %462 = vmatpush2.bf16.msra.mxu0 0
        %463 = vmatprep.mubr.bf16.mxu0 0
        %464 = vmatmul.mubr.bf16.gmra.mxu0 %v429
        %v465 = vpop.f32.mrf.mxu0
        %v466 = vadd.f32 0.0, %v465
        %v467 = vpop.f32.mrf.mxu0
        %v468 = vpop.f32.mrf.mxu0
        %v469 = vpop.f32.mrf.mxu0
        %470 = vdwg.mxu0
        %v472 = vrot.slane %v466, 1
        %v473 = vrot.slane %v466, 2
        %v474 = vrot.slane %v466, 3
        %v479 = vadd.f32 %v381, %v466
        %v480 = vadd.f32 %v382, %v472
        %v481 = vadd.f32 %v383, %v473
        %v482 = vadd.f32 %v384, %v474
        %483 = vst [vmem:[#allocation2 + $0x1] sm:$0x1] %v479
        %484 = vst [vmem:[#allocation2 + $0x5] sm:$0x1] %v480
        %485 = vst [vmem:[#allocation2 + $0x9] sm:$0x1] %v481
        %486 = vst [vmem:[#allocation2 + $0xd] sm:$0x1] %v482
        %v487 = vld [vmem:[%s220] sm:$0x2]
        %v488 = vld [vmem:[%s220 + $0x2] sm:$0x2]
        %v489 = vld [vmem:[%s220 + $0x4] sm:$0x2]
        %v490 = vld [vmem:[%s220 + $0x6] sm:$0x2]
        %v491 = vld [vmem:[#allocation2 + $0x2] sm:$0x1]
        %v492 = vld [vmem:[#allocation2 + $0x6] sm:$0x1]
        %v493 = vld [vmem:[#allocation2 + $0xa] sm:$0x1]
        %v494 = vld [vmem:[#allocation2 + $0xe] sm:$0x1]
        %v500 = vunpack.c.l.s4 1983009808
        %v501 = vunpack.c.0.s8 %v500
        %v502 = vlaneseq
        %v503 = vshrl.u32 %v502, 7
        %v504 = vsub.s32 %v501, %v503
        %v505 = vrot.slane %v487, %v504
        %v507 = vunpack.c.l.s4 1983009808
        %v508 = vunpack.c.0.s8 %v507
        %v509 = vlaneseq
        %v510 = vshrl.u32 %v509, 7
        %v511 = vsub.s32 %v508, %v510
        %v512 = vrot.slane %v488, %v511
        %v514 = vunpack.c.l.s4 1983009808
        %v515 = vunpack.c.0.s8 %v514
        %v516 = vlaneseq
        %v517 = vshrl.u32 %v516, 7
        %v518 = vsub.s32 %v515, %v517
        %v519 = vrot.slane %v489, %v518
        %v521 = vunpack.c.l.s4 1983009808
        %v522 = vunpack.c.0.s8 %v521
        %v523 = vlaneseq
        %v524 = vshrl.u32 %v523, 7
        %v525 = vsub.s32 %v522, %v524
        %v526 = vrot.slane %v490, %v525
        %v527 = vunpack.c.l.b16 %v505
        %v528 = vunpack.c.l.b16 %v512
        %v529 = vunpack.c.l.b16 %v519
        %v530 = vunpack.c.l.b16 %v526
        %v531 = vrot.slane %v527, 2
        %v532 = vrot.slane %v528, 1
        %v533 = vsel %vm302, %v532, %v531
        %v534 = vsel %vm305, %v529, %v533
        %v535 = vrot.slane %v530, 7
        %v536 = vsel %vm308, %v535, %v534
        %v537 = vpack.c.b16 %v536, %v536
        %v539 = vsel %vm317, %v537, 0
        %541 = vmatprep.subr.bf16.mxu0 0
        %542 = vmatpush1.bf16.msra.mxu0 0
        %543 = vmatprep.subr.bf16.mxu0 0
        %544 = vmatpush1.bf16.msra.mxu0 0
        %545 = vmatprep.subr.bf16.mxu0 0
        %546 = vmatpush1.bf16.msra.mxu0 0
        %547 = vmatprep.subr.bf16.mxu0 0
        %548 = vmatpush1.bf16.msra.mxu0 0
        %549 = vmatprep.subr.bf16.mxu0 0
        %550 = vmatpush1.bf16.msra.mxu0 0
        %551 = vmatprep.subr.bf16.mxu0 0
        %552 = vmatpush1.bf16.msra.mxu0 0
        %553 = vmatprep.subr.bf16.mxu0 0
        %554 = vmatpush1.bf16.msra.mxu0 0
        %555 = vmatprep.subr.bf16.mxu0 0
        %556 = vmatpush1.bf16.msra.mxu0 %v315
        %557 = vmatprep.subr.bf16.mxu0 0
        %558 = vmatpush2.bf16.msra.mxu0 0
        %559 = vmatprep.subr.bf16.mxu0 0
        %560 = vmatpush2.bf16.msra.mxu0 0
        %561 = vmatprep.subr.bf16.mxu0 0
        %562 = vmatpush2.bf16.msra.mxu0 0
        %563 = vmatprep.subr.bf16.mxu0 0
        %564 = vmatpush2.bf16.msra.mxu0 0
        %565 = vmatprep.subr.bf16.mxu0 0
        %566 = vmatpush2.bf16.msra.mxu0 0
        %567 = vmatprep.subr.bf16.mxu0 0
        %568 = vmatpush2.bf16.msra.mxu0 0
        %569 = vmatprep.subr.bf16.mxu0 0
        %570 = vmatpush2.bf16.msra.mxu0 0
        %571 = vmatprep.subr.bf16.mxu0 0
        %572 = vmatpush2.bf16.msra.mxu0 0
        %573 = vmatprep.mubr.bf16.mxu0 0
        %574 = vmatmul.mubr.bf16.gmra.mxu0 %v539
        %v575 = vpop.f32.mrf.mxu0
        %v576 = vadd.f32 0.0, %v575
        %v577 = vpop.f32.mrf.mxu0
        %v578 = vpop.f32.mrf.mxu0
        %v579 = vpop.f32.mrf.mxu0
        %580 = vdwg.mxu0
        %v582 = vrot.slane %v576, 1
        %v583 = vrot.slane %v576, 2
        %v584 = vrot.slane %v576, 3
        %v589 = vadd.f32 %v491, %v576
        %v590 = vadd.f32 %v492, %v582
        %v591 = vadd.f32 %v493, %v583
        %v592 = vadd.f32 %v494, %v584
        %593 = vst [vmem:[#allocation2 + $0x2] sm:$0x1] %v589
        %594 = vst [vmem:[#allocation2 + $0x6] sm:$0x1] %v590
        %595 = vst [vmem:[#allocation2 + $0xa] sm:$0x1] %v591
        %596 = vst [vmem:[#allocation2 + $0xe] sm:$0x1] %v592
        %v597 = vld [vmem:[%s220] sm:$0x2]
        %v598 = vld [vmem:[%s220 + $0x2] sm:$0x2]
        %v599 = vld [vmem:[%s220 + $0x4] sm:$0x2]
        %v600 = vld [vmem:[%s220 + $0x6] sm:$0x2]
        %v601 = vld [vmem:[#allocation2 + $0x3] sm:$0x1]
        %v602 = vld [vmem:[#allocation2 + $0x7] sm:$0x1]
        %v603 = vld [vmem:[#allocation2 + $0xb] sm:$0x1]
        %v604 = vld [vmem:[#allocation2 + $0xf] sm:$0x1]
        %v610 = vunpack.c.l.s4 1983009808
        %v611 = vunpack.c.0.s8 %v610
        %v612 = vlaneseq
        %v613 = vshrl.u32 %v612, 7
        %v614 = vsub.s32 %v611, %v613
        %v615 = vrot.slane %v597, %v614
        %v617 = vunpack.c.l.s4 1983009808
        %v618 = vunpack.c.0.s8 %v617
        %v619 = vlaneseq
        %v620 = vshrl.u32 %v619, 7
        %v621 = vsub.s32 %v618, %v620
        %v622 = vrot.slane %v598, %v621
        %v624 = vunpack.c.l.s4 1983009808
        %v625 = vunpack.c.0.s8 %v624
        %v626 = vlaneseq
        %v627 = vshrl.u32 %v626, 7
        %v628 = vsub.s32 %v625, %v627
        %v629 = vrot.slane %v599, %v628
        %v631 = vunpack.c.l.s4 1983009808
        %v632 = vunpack.c.0.s8 %v631
        %v633 = vlaneseq
        %v634 = vshrl.u32 %v633, 7
        %v635 = vsub.s32 %v632, %v634
        %v636 = vrot.slane %v600, %v635
        %v637 = vunpack.c.l.b16 %v615
        %v638 = vunpack.c.l.b16 %v622
        %v639 = vunpack.c.l.b16 %v629
        %v640 = vunpack.c.l.b16 %v636
        %v641 = vrot.slane %v637, 3
        %v642 = vrot.slane %v638, 2
        %v643 = vsel %vm302, %v642, %v641
        %v644 = vrot.slane %v639, 1
        %v645 = vsel %vm305, %v644, %v643
        %v646 = vsel %vm308, %v640, %v645
        %v647 = vpack.c.b16 %v646, %v646
        %v649 = vsel %vm317, %v647, 0
        %651 = vmatprep.subr.bf16.mxu0 0
        %652 = vmatpush1.bf16.msra.mxu0 0
        %653 = vmatprep.subr.bf16.mxu0 0
        %654 = vmatpush1.bf16.msra.mxu0 0
        %655 = vmatprep.subr.bf16.mxu0 0
        %656 = vmatpush1.bf16.msra.mxu0 0
        %657 = vmatprep.subr.bf16.mxu0 0
        %658 = vmatpush1.bf16.msra.mxu0 0
        %659 = vmatprep.subr.bf16.mxu0 0
        %660 = vmatpush1.bf16.msra.mxu0 0
        %661 = vmatprep.subr.bf16.mxu0 0
        %662 = vmatpush1.bf16.msra.mxu0 0
        %663 = vmatprep.subr.bf16.mxu0 0
        %664 = vmatpush1.bf16.msra.mxu0 0
        %665 = vmatprep.subr.bf16.mxu0 0
        %666 = vmatpush1.bf16.msra.mxu0 %v315
        %667 = vmatprep.subr.bf16.mxu0 0
        %668 = vmatpush2.bf16.msra.mxu0 0
        %669 = vmatprep.subr.bf16.mxu0 0
        %670 = vmatpush2.bf16.msra.mxu0 0
        %671 = vmatprep.subr.bf16.mxu0 0
        %672 = vmatpush2.bf16.msra.mxu0 0
        %673 = vmatprep.subr.bf16.mxu0 0
        %674 = vmatpush2.bf16.msra.mxu0 0
        %675 = vmatprep.subr.bf16.mxu0 0
        %676 = vmatpush2.bf16.msra.mxu0 0
        %677 = vmatprep.subr.bf16.mxu0 0
        %678 = vmatpush2.bf16.msra.mxu0 0
        %679 = vmatprep.subr.bf16.mxu0 0
        %680 = vmatpush2.bf16.msra.mxu0 0
        %681 = vmatprep.subr.bf16.mxu0 0
        %682 = vmatpush2.bf16.msra.mxu0 0
        %683 = vmatprep.mubr.bf16.mxu0 0
        %684 = vmatmul.mubr.bf16.gmra.mxu0 %v649
        %v685 = vpop.f32.mrf.mxu0
        %v686 = vadd.f32 0.0, %v685
        %v687 = vpop.f32.mrf.mxu0
        %v688 = vpop.f32.mrf.mxu0
        %v689 = vpop.f32.mrf.mxu0
        %690 = vdwg.mxu0
        %v692 = vrot.slane %v686, 1
        %v693 = vrot.slane %v686, 2
        %v694 = vrot.slane %v686, 3
        %v699 = vadd.f32 %v601, %v686
        %v700 = vadd.f32 %v602, %v692
        %v701 = vadd.f32 %v603, %v693
        %v702 = vadd.f32 %v604, %v694
        %703 = vst [vmem:[#allocation2 + $0x3] sm:$0x1] %v699
        %704 = vst [vmem:[#allocation2 + $0x7] sm:$0x1] %v700
        %705 = vst [vmem:[#allocation2 + $0xb] sm:$0x1] %v701
        %706 = vst [vmem:[#allocation2 + $0xf] sm:$0x1] %v702
        %p707 = scmp.eq.s32.totalorder %s22, 3
        // Predicated region
        $region78: #{patch_embed_forward.1} parent=68 // pred_check
          %p708 = pneg %p707
        $region79: #{patch_embed_forward.1} parent=68 // pred_check_branch
          %710 = sbr.rel (%p708) target = $region81
        $region80: #{patch_embed_forward.1} parent=68 // pred_region
          %v711 = vld [vmem:[#allocation2] sm:$0xf]
          %v712 = vld [vmem:[#allocation2 + $0x4] sm:$0xf]
          %v713 = vld [vmem:[#allocation2 + $0x8] sm:$0xf]
          %v714 = vld [vmem:[#allocation2 + $0xc] sm:$0xf]
          %v715 = vld [vmem:[%s2] sm:$0x1]
          %v717 = vlaneseq
          %v718 = vshrl.u32 %v717, 7
          %v719 = vsub.s32 0, %v718
          %v720 = vrot.slane %v715, %v719
          %v722 = vadd.f32 %v711, %v720
          %v723 = vadd.f32 %v712, %v720
          %v724 = vadd.f32 %v713, %v720
          %v725 = vadd.f32 %v714, %v720
          %726 = vst [vmem:[%s240] sm:$0xf] %v722
          %727 = vst [vmem:[%s240 + $0x4] sm:$0xf] %v723
          %728 = vst [vmem:[%s240 + $0x8] sm:$0xf] %v724
          %729 = vst [vmem:[%s240 + $0xc] sm:$0xf] %v725
        $region81: #{patch_embed_forward.1} parent=68 // pred_fallthru
          _
        %s730 = sand.u32 %s107, 1
        %s731 = scalar_lea.sflag [#allocation5], %s730
        %s732 = sand.u32 %s107, 1
        %s733 = smul.addr %s732, 16
        %s734 = scalar_lea.vmem [#allocation4], %s733
        // Predicated region
        $region82: #{patch_embed_forward.1} parent=68 // pred_check
          %p735 = pneg %p117
        $region83: #{patch_embed_forward.1} parent=68 // pred_check_branch
          %737 = sbr.rel (%p735) target = $region85
        $region84: #{patch_embed_forward.1} parent=68 // pred_region
          %s738 = smul.u32 4, %s21
          %s740 = ssub.s32 256, 256
          %741 = vsyncadd %s731, %s740
          %s742 = smul.addr %s738, 64
          %s743 = scalar_lea.hbm %s3, %s742
          %s744 = sshll.u32 %s734, 4
          %s745 = int_to_ptr.vmem [resolvable:$true] %s744
          %750 = dma.vmem_to_hbm [thread:$0]  %s745, 256, %s743, %s731, 64, 64, 4
        $region85: #{patch_embed_forward.1} parent=68 // pred_fallthru
          _
      $region69: #{patch_embed_forward.1} parent=5 // pred_fallthru
        _
      %p751 = scmp.le.s32.totalorder 2, %s12
      // Predicated region
      $region86: #{patch_embed_forward.1} parent=5 // pred_check
        %p752 = pneg %p751
      $region87: #{patch_embed_forward.1} parent=5 // pred_check_branch
        %754 = sbr.rel (%p752) target = $region89
      $region88: #{patch_embed_forward.1} parent=5 // pred_region
        %s755 = ssub.s32 %s12, 2
        // Predicated region
        $region90: #{patch_embed_forward.1} parent=88 // pred_check
          %p756 = pneg %p123
        $region91: #{patch_embed_forward.1} parent=88 // pred_check_branch
          %758 = sbr.rel (%p756) target = $region93
        $region92: #{patch_embed_forward.1} parent=88 // pred_region
          %s759 = sand.u32 %s108, 1
          %s760 = scalar_lea.sflag [#allocation5], %s759
          %s761 = sand.u32 %s108, 1
          %s762 = smul.addr %s761, 16
          %s763 = scalar_lea.vmem [#allocation4], %s762
          %764 = dma.done %s760, 256
        $region93: #{patch_embed_forward.1} parent=88 // pred_fallthru
          _
      $region89: #{patch_embed_forward.1} parent=5 // pred_fallthru
        _
    $region6: #{patch_embed_forward.1} parent=1 // loop_footer
      %s16 = sadd.s32 1, %s12
    $region7: #{patch_embed_forward.1} parent=1 // loop_footer_branch
      %11 = sbr.rel target = $region3
    $region8: #{patch_embed_forward.1} parent=1 // loop_exit
      _
    %765 = vsyncpa [#allocation5], 1
    %s766 = scalar_lea.sflag [#allocation5], 1
    %767 = vsyncpa %s766, 1

</llo_original>
